<compile_context>
chip_gen: v5e
topology: v5e:2x2
jax: 0.10.0
libtpu: 0.0.40
codegen_flags: <defaults>
</compile_context>

<pallas_src>
import jax
import jax.numpy as jnp
from jax.experimental import pallas as pl
from jax.experimental.pallas import tpu as pltpu


def fused_conv_bn_kernel(x_ref, p_ref, o_ref):
    """x_ref: (N, C, L) input in native channels-first layout (full VMEM block).
    p_ref : (C, C+3) packed params: [:, :C] = conv W (Cout, Cin),
            [:, C] = conv bias, [:, C+1] = bn gamma, [:, C+2] = bn beta.
    o_ref : (N, C, L) output."""
    eps = jnp.float32(1e-5)
    n, c, l = x_ref.shape
    nl = n * l
    inv_nl = jnp.float32(1.0 / nl)

    p = p_ref[...]                       # (C, C+3)
    w = p[:, :c]                         # (Cout, Cin) — used as-is, no transpose
    b = p[:, c:c + 1]                    # (C, 1) conv bias
    gamma = p[:, c + 1:c + 2]            # (C, 1)
    beta = p[:, c + 2:c + 3]             # (C, 1)

    # (N, C, L) -> (C, N*L) slab built in-VMEM (no wrapper transpose / HBM pass).
    if n == 1:
        v = x_ref[0]                                               # (C, L)
    else:
        x3 = x_ref[...]
        v = jnp.concatenate([x3[i] for i in range(n)], axis=-1)    # (C, N*L)

    def conv(u):
        # 1x1 Conv1d in channels-first layout: (C,C) @ (C,NL) + bias.
        return jnp.dot(w, u, preferred_element_type=jnp.float32) + b

    def bn_then_conv(u):
        # Single-pass biased batch stats over N*L per channel.
        mean = jnp.sum(u, axis=-1, keepdims=True) * inv_nl          # (C, 1)
        mean_sq = jnp.sum(u * u, axis=-1, keepdims=True) * inv_nl   # (C, 1)
        var = mean_sq - mean * mean                                  # biased var
        a = gamma * jax.lax.rsqrt(var + eps)                         # (C, 1)
        # Fold BN scale AND shift into the conv operand:
        #   conv(BN(u)) = W @ (a*u + (beta - a*mean)) + b
        # -> one MXU dot per stage, no extra matvec on the serial chain.
        return jnp.dot(w, a * u + (beta - a * mean),
                       preferred_element_type=jnp.float32) + b

    y = conv(v)
    y = bn_then_conv(y)
    y = bn_then_conv(y)
    y = y.astype(o_ref.dtype)

    # Write back in native (N, C, L) layout.
    if n == 1:
        o_ref[0] = y
    else:
        for i in range(n):
            o_ref[i] = y[:, i * l:(i + 1) * l]


def pack_params(conv_w, conv_b, bn_gamma, bn_beta):
    """Pack all tiny parameters once (init time) into a single (C, C+3) f32
    array so the per-call path has exactly 2 input DMAs and no wrapper ops."""
    c = conv_b.shape[0]
    return jnp.concatenate(
        [conv_w.reshape(c, c),
         conv_b.reshape(c, 1),
         bn_gamma.reshape(c, 1),
         bn_beta.reshape(c, 1)],
        axis=1,
    ).astype(jnp.float32)


def model_forward(x_ncl, params):
    """x_ncl: (N, C, L) float32. params: packed (C, C+3) from pack_params().
    Returns (N, C, L) float32. Per-call path = the pallas_call only."""
    n, c, l = x_ncl.shape
    nl = n * l

    # Advisory cost hint so XLA schedules around the custom call sensibly.
    flops = 3 * 2 * c * c * nl + 10 * c * nl
    cost = pl.CostEstimate(
        flops=flops,
        transcendentals=2 * c,
        bytes_accessed=4 * (2 * c * nl + c * (c + 3)),
    )

    return pl.pallas_call(
        fused_conv_bn_kernel,
        out_shape=jax.ShapeDtypeStruct((n, c, l), jnp.float32),
        in_specs=[
            pl.BlockSpec(memory_space=pltpu.VMEM),
            pl.BlockSpec(memory_space=pltpu.VMEM),
        ],
        out_specs=pl.BlockSpec(memory_space=pltpu.VMEM),
        cost_estimate=cost,
    )(x_ncl, params)


def reference_forward(x_ncl, conv_w, conv_b, bn_gamma, bn_beta, eps=1e-5):
    """Pure-jnp reference (training-mode BN, biased variance)."""
    w = conv_w[..., 0]  # (Cout, Cin)

    def conv(v):
        return jnp.einsum('oc,ncl->nol', w, v) + conv_b[None, :, None]

    def bn(v):
        mu = jnp.mean(v, axis=(0, 2), keepdims=True)
        var = jnp.mean((v - mu) ** 2, axis=(0, 2), keepdims=True)
        return ((v - mu) * jax.lax.rsqrt(var + eps)
                * bn_gamma[None, :, None] + bn_beta[None, :, None])

    y = conv(x_ncl)
    y = bn(y)
    y = conv(y)
    y = bn(y)
    y = conv(y)
    return y


if __name__ == "__main__":
    key = jax.random.PRNGKey(0)
    k_x, k_w, k_b = jax.random.split(key, 3)

    N, C, L = 1, 4, 32  # matches torch.randn(1, 4, 32)

    x = jax.random.normal(k_x, (N, C, L), dtype=jnp.float32)

    # Conv1d(4, 4, 1) parameters — deterministic synthetic init
    # (uniform in +/- 1/sqrt(fan_in), like PyTorch's default).
    bound = 1.0 / (C * 1) ** 0.5
    conv_w = jax.random.uniform(k_w, (C, C, 1), jnp.float32, -bound, bound)
    conv_b = jax.random.uniform(k_b, (C,), jnp.float32, -bound, bound)

    # BatchNorm1d(4) affine params — default init (gamma=1, beta=0).
    bn_gamma = jnp.ones((C,), jnp.float32)
    bn_beta = jnp.zeros((C,), jnp.float32)

    # Init-time packing (hoisted out of the per-call path).
    params = pack_params(conv_w, conv_b, bn_gamma, bn_beta)
    jax.block_until_ready(params)

    fwd = jax.jit(model_forward)
    out = fwd(x, params)
    jax.block_until_ready(out)
    assert out.shape == (N, C, L), out.shape

    # Numerical check against the pure-jnp reference (BN fold reassociates
    # f32 math, so allow a loose tolerance).
    ref = reference_forward(x, conv_w, conv_b, bn_gamma, bn_beta)
    assert jnp.allclose(out, ref, rtol=1e-3, atol=1e-3), (
        float(jnp.max(jnp.abs(out - ref))))

    print("KERNEL_OK")
</pallas_src>

<mosaic_0001>
module attributes {stable_mosaic.version = 11 : i64} {
  func.func @fused_conv_bn_kernel(%arg0: memref<1x4x32xf32, #tpu.memory_space<vmem>>, %arg1: memref<4x7xf32, #tpu.memory_space<vmem>>, %arg2: memref<1x4x32xf32, #tpu.memory_space<vmem>>) attributes {dimension_semantics = [], scalar_prefetch = 0 : i64, scratch_operands = 0 : i64, tpu.core_type = #tpu.core_type<tc>} {
    %c0 = arith.constant 0 : index
    %c0_0 = arith.constant 0 : index
    %0 = vector.load %arg1[%c0, %c0_0] : memref<4x7xf32, #tpu.memory_space<vmem>>, vector<4x7xf32>
    %1 = vector.extract_strided_slice %0 {offsets = [0, 0], sizes = [4, 4], strides = [1, 1]} : vector<4x7xf32> to vector<4x4xf32>
    %2 = vector.extract_strided_slice %0 {offsets = [0, 4], sizes = [4, 1], strides = [1, 1]} : vector<4x7xf32> to vector<4x1xf32>
    %3 = vector.extract_strided_slice %0 {offsets = [0, 5], sizes = [4, 1], strides = [1, 1]} : vector<4x7xf32> to vector<4x1xf32>
    %4 = vector.extract_strided_slice %0 {offsets = [0, 6], sizes = [4, 1], strides = [1, 1]} : vector<4x7xf32> to vector<4x1xf32>
    %c0_1 = arith.constant 0 : index
    %c0_2 = arith.constant 0 : index
    %c0_3 = arith.constant 0 : index
    %5 = vector.load %arg0[%c0_1, %c0_2, %c0_3] : memref<1x4x32xf32, #tpu.memory_space<vmem>>, vector<1x4x32xf32>
    %6 = vector.shape_cast %5 : vector<1x4x32xf32> to vector<4x32xf32>
    %cst = arith.constant dense<0.000000e+00> : vector<4x32xf32>
    %7 = tpu.matmul %1, %6, %cst {dimension_numbers = #tpu.dot_dimension_numbers<[1], [0], [0], [1], [0, 0, 1, 1], [], []>} : vector<4x4xf32>, vector<4x32xf32>, vector<4x32xf32> -> vector<4x32xf32>
    %8 = vector.broadcast %2 : vector<4x1xf32> to vector<4x32xf32>
    %9 = arith.addf %7, %8 : vector<4x32xf32>
    %cst_4 = arith.constant dense<0.000000e+00> : vector<4xf32>
    %10 = vector.multi_reduction <add>, %9, %cst_4 [1] : vector<4x32xf32> to vector<4xf32>
    %11 = vector.shape_cast %10 : vector<4xf32> to vector<4x1xf32>
    %cst_5 = arith.constant 3.125000e-02 : f32
    %12 = vector.broadcast %cst_5 : f32 to vector<4x1xf32>
    %13 = arith.mulf %11, %12 : vector<4x1xf32>
    %14 = arith.mulf %9, %9 : vector<4x32xf32>
    %cst_6 = arith.constant dense<0.000000e+00> : vector<4xf32>
    %15 = vector.multi_reduction <add>, %14, %cst_6 [1] : vector<4x32xf32> to vector<4xf32>
    %16 = vector.shape_cast %15 : vector<4xf32> to vector<4x1xf32>
    %cst_7 = arith.constant 3.125000e-02 : f32
    %17 = vector.broadcast %cst_7 : f32 to vector<4x1xf32>
    %18 = arith.mulf %16, %17 : vector<4x1xf32>
    %19 = arith.mulf %13, %13 : vector<4x1xf32>
    %20 = arith.subf %18, %19 : vector<4x1xf32>
    %cst_8 = arith.constant 9.99999974E-6 : f32
    %21 = vector.broadcast %cst_8 : f32 to vector<4x1xf32>
    %22 = arith.addf %20, %21 : vector<4x1xf32>
    %23 = math.rsqrt %22 : vector<4x1xf32>
    %24 = arith.mulf %3, %23 : vector<4x1xf32>
    %25 = vector.broadcast %24 : vector<4x1xf32> to vector<4x32xf32>
    %26 = arith.mulf %25, %9 : vector<4x32xf32>
    %27 = arith.mulf %24, %13 : vector<4x1xf32>
    %28 = arith.subf %4, %27 : vector<4x1xf32>
    %29 = vector.broadcast %28 : vector<4x1xf32> to vector<4x32xf32>
    %30 = arith.addf %26, %29 : vector<4x32xf32>
    %cst_9 = arith.constant dense<0.000000e+00> : vector<4x32xf32>
    %31 = tpu.matmul %1, %30, %cst_9 {dimension_numbers = #tpu.dot_dimension_numbers<[1], [0], [0], [1], [0, 0, 1, 1], [], []>} : vector<4x4xf32>, vector<4x32xf32>, vector<4x32xf32> -> vector<4x32xf32>
    %32 = vector.broadcast %2 : vector<4x1xf32> to vector<4x32xf32>
    %33 = arith.addf %31, %32 : vector<4x32xf32>
    %cst_10 = arith.constant dense<0.000000e+00> : vector<4xf32>
    %34 = vector.multi_reduction <add>, %33, %cst_10 [1] : vector<4x32xf32> to vector<4xf32>
    %35 = vector.shape_cast %34 : vector<4xf32> to vector<4x1xf32>
    %cst_11 = arith.constant 3.125000e-02 : f32
    %36 = vector.broadcast %cst_11 : f32 to vector<4x1xf32>
    %37 = arith.mulf %35, %36 : vector<4x1xf32>
    %38 = arith.mulf %33, %33 : vector<4x32xf32>
    %cst_12 = arith.constant dense<0.000000e+00> : vector<4xf32>
    %39 = vector.multi_reduction <add>, %38, %cst_12 [1] : vector<4x32xf32> to vector<4xf32>
    %40 = vector.shape_cast %39 : vector<4xf32> to vector<4x1xf32>
    %cst_13 = arith.constant 3.125000e-02 : f32
    %41 = vector.broadcast %cst_13 : f32 to vector<4x1xf32>
    %42 = arith.mulf %40, %41 : vector<4x1xf32>
    %43 = arith.mulf %37, %37 : vector<4x1xf32>
    %44 = arith.subf %42, %43 : vector<4x1xf32>
    %cst_14 = arith.constant 9.99999974E-6 : f32
    %45 = vector.broadcast %cst_14 : f32 to vector<4x1xf32>
    %46 = arith.addf %44, %45 : vector<4x1xf32>
    %47 = math.rsqrt %46 : vector<4x1xf32>
    %48 = arith.mulf %3, %47 : vector<4x1xf32>
    %49 = vector.broadcast %48 : vector<4x1xf32> to vector<4x32xf32>
    %50 = arith.mulf %49, %33 : vector<4x32xf32>
    %51 = arith.mulf %48, %37 : vector<4x1xf32>
    %52 = arith.subf %4, %51 : vector<4x1xf32>
    %53 = vector.broadcast %52 : vector<4x1xf32> to vector<4x32xf32>
    %54 = arith.addf %50, %53 : vector<4x32xf32>
    %cst_15 = arith.constant dense<0.000000e+00> : vector<4x32xf32>
    %55 = tpu.matmul %1, %54, %cst_15 {dimension_numbers = #tpu.dot_dimension_numbers<[1], [0], [0], [1], [0, 0, 1, 1], [], []>} : vector<4x4xf32>, vector<4x32xf32>, vector<4x32xf32> -> vector<4x32xf32>
    %56 = vector.broadcast %2 : vector<4x1xf32> to vector<4x32xf32>
    %57 = arith.addf %55, %56 : vector<4x32xf32>
    %c0_16 = arith.constant 0 : index
    %c0_17 = arith.constant 0 : index
    %c0_18 = arith.constant 0 : index
    %58 = vector.load %arg2[%c0_16, %c0_17, %c0_18] : memref<1x4x32xf32, #tpu.memory_space<vmem>>, vector<1x4x32xf32>
    %59 = vector.shape_cast %58 : vector<1x4x32xf32> to vector<4x32xf32>
    %60 = vector.shape_cast %57 : vector<4x32xf32> to vector<1x4x32xf32>
    tpu.vector_store %arg2[%c0_16, %c0_17, %c0_18], %60 {strides = array<i32>} : memref<1x4x32xf32, #tpu.memory_space<vmem>>, vector<1x4x32xf32>,
    return
  }
}

</mosaic_0001>

<llo_original>
// kernel: model_forward.1
$region0: #{model_forward.1}
  #allocation0 [shape = 'u32[]', space=smem, size = 0x4, offset = 0x4, fixed_abs, tag = 'smem constant byte address 0x4 - core index']
  #allocation1 [shape = 'u32[72,128]{1,0:T(1,128)}', space=vmem, size = 0x9000, scoped, tag = 'internal scratch']
  %s0 = inlined_call_operand.hbm [shape: f32[1,4,32], index: 0, kind: input, shape index: {}]
  %s1 = inlined_call_operand.hbm [shape: f32[4,7], index: 1, kind: input, shape index: {}]
  %s2 = inlined_call_operand.hbm [shape: f32[1,4,32], index: 2, kind: output, shape index: {}]
  %s3 = sld [smem:[#allocation0]]
  $region26: #{model_forward.1} parent=0
    _
  %s5 = ssub.s32 1, %s3
  %s6 = scalar_select 0, %s5, %s3
  $region1: #{model_forward.1} parent=0
    #allocation2 [shape = 'u8[2048]{0}', space=vmem, size = 0x800, scoped, tag = 'input window, operand 0, single buffered']
    #allocation3 [shape = 's32[1]{0}', space=sflag, size = 0x4, scoped, tag = 'scoped memory for model_forward.1']
    #allocation4 [shape = 's32[1]{0}', space=sflag, size = 0x4, scoped, tag = 'scoped memory for model_forward.1']
    #allocation5 [shape = 'u8[2048]{0}', space=vmem, size = 0x800, scoped, tag = 'input window, operand 1, single buffered']
    #allocation6 [shape = 's32[1]{0}', space=sflag, size = 0x4, scoped, tag = 'scoped memory for model_forward.1']
    #allocation7 [shape = 'u8[2048]{0}', space=vmem, size = 0x800, scoped, tag = 'output window, operand 0, single buffered']
    %7 = vsyncpa [#allocation3], 0
    %8 = vsyncpa [#allocation6], 0
    %9 = vsyncpa [#allocation4], 0
    // Predicated region
    $region2: #{model_forward.1} parent=1 // pred_check
      _
    $region3: #{model_forward.1} parent=1 // pred_check_branch
      %11 = sbr.rel (0) target = $region5
    $region4: #{model_forward.1} parent=1 // pred_region
      %13 = vsyncadd [#allocation3], 0
      %s15 = sshll.u32 %s0, 4
      %s16 = int_to_ptr.hbm [resolvable:$true] %s15
      %s17 = sshll.u32 [#allocation2], 4
      %s18 = int_to_ptr.vmem [resolvable:$true] %s17
      %20 = dma.hbm_to_vmem [thread:$0]  %s16, 64, %s18, [#allocation3]
    $region5: #{model_forward.1} parent=1 // pred_fallthru
      _
    // Predicated region
    $region6: #{model_forward.1} parent=1 // pred_check
      _
    $region7: #{model_forward.1} parent=1 // pred_check_branch
      %22 = sbr.rel (0) target = $region9
    $region8: #{model_forward.1} parent=1 // pred_region
      %24 = vsyncadd [#allocation6], 0
      %s26 = sshll.u32 %s1, 4
      %s27 = int_to_ptr.hbm [resolvable:$true] %s26
      %s28 = sshll.u32 [#allocation5], 4
      %s29 = int_to_ptr.vmem [resolvable:$true] %s28
      %31 = dma.hbm_to_vmem [thread:$0]  %s27, 64, %s29, [#allocation6]
    $region9: #{model_forward.1} parent=1 // pred_fallthru
      _
    // Predicated region
    $region10: #{model_forward.1} parent=1 // pred_check
      _
    $region11: #{model_forward.1} parent=1 // pred_check_branch
      %33 = sbr.rel (0) target = $region13
    $region12: #{model_forward.1} parent=1 // pred_region
      %35 = dma.done [#allocation3], 64
    $region13: #{model_forward.1} parent=1 // pred_fallthru
      _
    // Predicated region
    $region14: #{model_forward.1} parent=1 // pred_check
      _
    $region15: #{model_forward.1} parent=1 // pred_check_branch
      %37 = sbr.rel (0) target = $region17
    $region16: #{model_forward.1} parent=1 // pred_region
      %39 = dma.done [#allocation6], 64
    $region17: #{model_forward.1} parent=1 // pred_fallthru
      _
    %v40 = vld [vmem:[#allocation5] sm:$0xf]
    %v41 = vld [vmem:[#allocation2] sm:$0xf]
    %43 = vset.pattern.permute.xlu0 4
    %44 = vperm.xlu0 %43, %v40
    %v45 = vpop.permute.xlu0 %44
    %vm47 = vcmask 31744
    %v48 = vsel %vm47, %v40, 0
    %vm50 = vcmask 1043456
    %v52 = vsel %vm50, %v41, 0
    %54 = vmatpush.msra.mxu0 0.0
    %55 = vmatpush.msra.mxu0 0.0
    %56 = vmatpush.msra.mxu0 0.0
    %57 = vmatpush.msra.mxu0 0.0
    %58 = vmatpush.msra.mxu0 0.0
    %59 = vmatpush.msra.mxu0 0.0
    %60 = vmatpush.msra.mxu0 0.0
    %61 = vmatpush.msra.mxu0 0.0
    %62 = vmatpush.msra.mxu0 0.0
    %63 = vmatpush.msra.mxu0 0.0
    %64 = vmatpush.msra.mxu0 0.0
    %65 = vmatpush.msra.mxu0 0.0
    %66 = vmatpush.msra.mxu0 0.0
    %67 = vmatpush.msra.mxu0 0.0
    %68 = vmatpush.msra.mxu0 0.0
    %69 = vmatpush.msra.mxu0 %v52
    %70 = vmatmul.f32.gmra.mxu0 %v48
    %v71 = vpop.f32.mrf.mxu0
    %v72 = vadd.f32 %v45, %v71
    %73 = vdwg.mxu0
    %vm74 = vcmask 257024
    %v75 = vsel %vm74, %v72, 0.0
    %76 = vadd.xlane.f32.xlu0 %v75
    %v77 = vpop.xlane.xlu0 %76
    %v78 = vmul.f32 %v77, 0.03125
    %v79 = vmul.f32 %v72, %v72
    %v80 = vsel %vm74, %v79, 0.0
    %81 = vadd.xlane.f32.xlu0 %v80
    %v82 = vpop.xlane.xlu0 %81
    %v83 = vmul.f32 %v82, 0.03125
    %v84 = vmul.f32 %v78, %v78
    %v85 = vsub.f32 %v83, %v84
    %v86 = vadd.f32 %v85, 1e-05
    %v87 = vrsqrt.pop %v86
    %v88 = vmul.f32 %v87, %v86
    %v89 = vmul.f32 %v88, %v87
    %v90 = vmul.f32 0.5, %v89
    %v91 = vsub.f32 1.5, %v90
    %v92 = vmul.f32 %v87, %v91
    %vm93 = vweird.f32 %v86
    %vm94 = vweird.f32 %v87
    %vm95 = vmor %vm93, %vm94
    %v96 = vsel %vm95, %v87, %v92
    %v97 = vmul.f32 %v40, %v96
    %99 = vset.pattern.permute.xlu0 5
    %100 = vperm.xlu0 %99, %v97
    %v101 = vpop.permute.xlu0 %100
    %v103 = vmul.f32 %v101, %v72
    %v104 = vmul.f32 %v97, %v78
    %106 = vrot.lane.b32.xlu0 %v104, 1
    %v107 = vpop.permute.xlu0 %106
    %v109 = vsub.f32 %v40, %v107
    %111 = vset.pattern.permute.xlu0 6
    %112 = vperm.xlu0 %111, %v109
    %v113 = vpop.permute.xlu0 %112
    %v115 = vadd.f32 %v103, %v113
    %v117 = vsel %vm50, %v115, 0
    %119 = vmatpush.msra.mxu0 0.0
    %120 = vmatpush.msra.mxu0 0.0
    %121 = vmatpush.msra.mxu0 0.0
    %122 = vmatpush.msra.mxu0 0.0
    %123 = vmatpush.msra.mxu0 0.0
    %124 = vmatpush.msra.mxu0 0.0
    %125 = vmatpush.msra.mxu0 0.0
    %126 = vmatpush.msra.mxu0 0.0
    %127 = vmatpush.msra.mxu0 0.0
    %128 = vmatpush.msra.mxu0 0.0
    %129 = vmatpush.msra.mxu0 0.0
    %130 = vmatpush.msra.mxu0 0.0
    %131 = vmatpush.msra.mxu0 0.0
    %132 = vmatpush.msra.mxu0 0.0
    %133 = vmatpush.msra.mxu0 0.0
    %134 = vmatpush.msra.mxu0 %v117
    %135 = vmatmul.f32.gmra.mxu0 %v48
    %v136 = vpop.f32.mrf.mxu0
    %v137 = vadd.f32 %v45, %v136
    %138 = vdwg.mxu0
    %v139 = vsel %vm74, %v137, 0.0
    %140 = vadd.xlane.f32.xlu0 %v139
    %v141 = vpop.xlane.xlu0 %140
    %v142 = vmul.f32 %v141, 0.03125
    %v143 = vmul.f32 %v137, %v137
    %v144 = vsel %vm74, %v143, 0.0
    %145 = vadd.xlane.f32.xlu0 %v144
    %v146 = vpop.xlane.xlu0 %145
    %v147 = vmul.f32 %v146, 0.03125
    %v148 = vmul.f32 %v142, %v142
    %v149 = vsub.f32 %v147, %v148
    %v150 = vadd.f32 %v149, 1e-05
    %v151 = vrsqrt.pop %v150
    %v152 = vmul.f32 %v151, %v150
    %v153 = vmul.f32 %v152, %v151
    %v154 = vmul.f32 0.5, %v153
    %v155 = vsub.f32 1.5, %v154
    %v156 = vmul.f32 %v151, %v155
    %vm157 = vweird.f32 %v150
    %vm158 = vweird.f32 %v151
    %vm159 = vmor %vm157, %vm158
    %v160 = vsel %vm159, %v151, %v156
    %v161 = vmul.f32 %v40, %v160
    %163 = vset.pattern.permute.xlu0 5
    %164 = vperm.xlu0 %163, %v161
    %v165 = vpop.permute.xlu0 %164
    %v167 = vmul.f32 %v165, %v137
    %v168 = vmul.f32 %v161, %v142
    %170 = vrot.lane.b32.xlu0 %v168, 1
    %v171 = vpop.permute.xlu0 %170
    %v173 = vsub.f32 %v40, %v171
    %175 = vset.pattern.permute.xlu0 6
    %176 = vperm.xlu0 %175, %v173
    %v177 = vpop.permute.xlu0 %176
    %v179 = vadd.f32 %v167, %v177
    %v181 = vsel %vm50, %v179, 0
    %183 = vmatpush.msra.mxu0 0.0
    %184 = vmatpush.msra.mxu0 0.0
    %185 = vmatpush.msra.mxu0 0.0
    %186 = vmatpush.msra.mxu0 0.0
    %187 = vmatpush.msra.mxu0 0.0
    %188 = vmatpush.msra.mxu0 0.0
    %189 = vmatpush.msra.mxu0 0.0
    %190 = vmatpush.msra.mxu0 0.0
    %191 = vmatpush.msra.mxu0 0.0
    %192 = vmatpush.msra.mxu0 0.0
    %193 = vmatpush.msra.mxu0 0.0
    %194 = vmatpush.msra.mxu0 0.0
    %195 = vmatpush.msra.mxu0 0.0
    %196 = vmatpush.msra.mxu0 0.0
    %197 = vmatpush.msra.mxu0 0.0
    %198 = vmatpush.msra.mxu0 %v181
    %199 = vmatmul.f32.gmra.mxu0 %v48
    %v200 = vpop.f32.mrf.mxu0
    %v201 = vadd.f32 %v45, %v200
    %202 = vdwg.mxu0
    %203 = vst.msk [vmem:[#allocation7] sm:$0xf] %vm74, %v201
    // Predicated region
    $region18: #{model_forward.1} parent=1 // pred_check
      _
    $region19: #{model_forward.1} parent=1 // pred_check_branch
      %205 = sbr.rel (0) target = $region21
    $region20: #{model_forward.1} parent=1 // pred_region
      %207 = vsyncadd [#allocation4], 0
      %s209 = sshll.u32 [#allocation7], 4
      %s210 = int_to_ptr.vmem [resolvable:$true] %s209
      %s211 = sshll.u32 %s2, 4
      %s212 = int_to_ptr.hbm [resolvable:$true] %s211
      %214 = dma.vmem_to_hbm [thread:$0]  %s210, 64, %s212, [#allocation4]
    $region21: #{model_forward.1} parent=1 // pred_fallthru
      _
    // Predicated region
    $region22: #{model_forward.1} parent=1 // pred_check
      _
    $region23: #{model_forward.1} parent=1 // pred_check_branch
      %216 = sbr.rel (0) target = $region25
    $region24: #{model_forward.1} parent=1 // pred_region
      %218 = dma.done [#allocation4], 64
    $region25: #{model_forward.1} parent=1 // pred_fallthru
      _
    %219 = vsyncpa [#allocation3], 1
    %220 = vsyncpa [#allocation6], 1
    %221 = vsyncpa [#allocation4], 1

</llo_original>
